<compile_context>
chip_gen: v5e
topology: v5e:2x2
jax: 0.10.0
libtpu: 0.0.40
codegen_flags: <defaults>
</compile_context>

<pallas_src>
import jax
import jax.numpy as jnp
from jax import lax
from jax.experimental import pallas as pl
from jax.experimental.pallas import tpu as pltpu


def mlp_kernel(x_ref, w1t_ref, b1_ref, w2t_ref, b2_ref, w3_ref, b3_ref, ot_ref):
    # x tile arrives in its native (B_TILE, IN) layout.  Contract the *last*
    # dims of w1^T (H, IN) and x (B_TILE, IN): an MXU trans_b matmul that lands
    # the batch on the lane axis for free -> (H, B_TILE), f32 accumulation.
    h1 = lax.dot_general(
        w1t_ref[...], x_ref[...],
        dimension_numbers=(((1,), (1,)), ((), ())),
        preferred_element_type=jnp.float32)                               # (H, B_TILE)
    h1 = jnp.maximum(h1 + b1_ref[...], 0.0)                               # (H,1) bias bcast over lanes
    # Layer 2: (H, H) @ (H, B_TILE) on the MXU.
    h2 = jnp.dot(w2t_ref[...], h1, preferred_element_type=jnp.float32)    # (H, B_TILE)
    h2 = jnp.maximum(h2 + b2_ref[...], 0.0)
    # Layer 3 (output width 1): VPU multiply + sublane reduce, not an M=1 matmul.
    z = jnp.sum(h2 * w3_ref[...], axis=0, keepdims=True)                  # (1, B_TILE)
    z = z + b3_ref[0, 0]                                                  # scalar bias from SMEM
    # Sigmoid: exp on the EUP; reciprocal instead of a VALU divide.
    e = jnp.exp(-z)
    ot_ref[...] = pl.reciprocal(1.0 + e, approx=False)                    # lane-dense store


def _round_up(n, m):
    return ((n + m - 1) // m) * m


def _cdiv(a, b):
    return -(-a // b)


def _batch_tiling(B, max_tile):
    """Pick (n_steps, b_tile, b_pad): large lane-aligned tiles, minimal padding,
    and >= 2 (even) grid steps for v7x's two TensorCores when B is big enough."""
    n_steps = _cdiv(B, max_tile)
    if n_steps == 1 and B >= 256:
        n_steps = 2                      # give both v7x TCs a tile
    if n_steps > 1 and n_steps % 2:
        n_steps += 1                     # even step count splits cleanly over 2 TCs
    if n_steps == 1:
        # Single full-array block: any B is a legal block shape (equals full dim).
        return 1, B, B
    b_tile = _round_up(_cdiv(B, n_steps), 128)   # pad only to the 128-lane granule
    return n_steps, b_tile, n_steps * b_tile


def action_conditioned_ff(x, params, max_batch_tile=8192):
    """Forward pass equivalent to Action_Conditioned_FF.forward (x: (B, input_size) f32)."""
    w1, b1, w2, b2, w3, b3 = params
    B, in_size = x.shape
    hidden = w1.shape[1]
    out_size = w3.shape[1]
    assert out_size == 1, "layer-3 reduction path assumes output_size == 1 (module default)"

    n_steps, b_tile, b_pad = _batch_tiling(B, max_batch_tile)

    # Weights in the transposed-layout forms the kernel consumes (tiny, resident).
    w1t = w1.T                                  # (H, IN): contracted against x's last dim
    b1c = b1.reshape(hidden, 1)
    w2t = w2.T                                  # (H, H)
    b2c = b2.reshape(hidden, 1)
    w3c = w3.reshape(hidden, out_size)          # (H, 1) column for the VPU reduce
    b3s = b3.reshape(1, 1)                      # scalar -> SMEM

    flops = 2 * b_pad * (in_size * hidden + hidden * hidden + hidden * out_size)
    bytes_accessed = 4 * (B * in_size + w1t.size + b1c.size + w2t.size + b2c.size
                          + w3c.size + b3s.size + b_pad * out_size)

    out_t = pl.pallas_call(
        mlp_kernel,
        out_shape=jax.ShapeDtypeStruct((1, b_pad), jnp.float32),
        grid=(n_steps,),
        in_specs=[
            pl.BlockSpec((b_tile, in_size), lambda i: (i, 0)),    # streamed x, native layout
            pl.BlockSpec((hidden, in_size), lambda i: (0, 0)),    # w1^T (resident)
            pl.BlockSpec((hidden, 1), lambda i: (0, 0)),          # b1
            pl.BlockSpec((hidden, hidden), lambda i: (0, 0)),     # w2^T
            pl.BlockSpec((hidden, 1), lambda i: (0, 0)),          # b2
            pl.BlockSpec((hidden, out_size), lambda i: (0, 0)),   # w3 column
            pl.BlockSpec(memory_space=pltpu.SMEM),                # b3 scalar
        ],
        out_specs=pl.BlockSpec((1, b_tile), lambda i: (0, i)),    # lane-dense output slab
        compiler_params=pltpu.CompilerParams(
            dimension_semantics=("parallel",),                    # v7x: shard tiles over 2 TCs
            vmem_limit_bytes=32 * 1024 * 1024),                   # headroom for big tiles on v5e
        cost_estimate=pl.CostEstimate(
            flops=flops, transcendentals=b_pad, bytes_accessed=bytes_accessed),
    )(x, w1t, b1c, w2t, b2c, w3c, b3s)

    return out_t.reshape(b_pad, 1)[:B]           # back to (B, 1); drop lane padding


def init_params(key, input_size=6, hidden_size=32, output_size=1):
    # Deterministic init mimicking PyTorch nn.Linear (uniform in [-1/sqrt(fan_in), 1/sqrt(fan_in)]).
    # Weights stored as (in_features, out_features), i.e. W.T of the PyTorch layer.
    ks = jax.random.split(key, 6)

    def linear(kw, kb, fan_in, fan_out):
        bound = 1.0 / jnp.sqrt(fan_in)
        w = jax.random.uniform(kw, (fan_in, fan_out), jnp.float32, -bound, bound)
        b = jax.random.uniform(kb, (1, fan_out), jnp.float32, -bound, bound)
        return w, b

    w1, b1 = linear(ks[0], ks[1], input_size, hidden_size)
    w2, b2 = linear(ks[2], ks[3], hidden_size, hidden_size)
    w3, b3 = linear(ks[4], ks[5], hidden_size, output_size)
    return (w1, b1, w2, b2, w3, b3)


def reference_forward(x, params):
    w1, b1, w2, b2, w3, b3 = params
    h1 = jnp.maximum(x @ w1 + b1, 0.0)
    h2 = jnp.maximum(h1 @ w2 + b2, 0.0)
    return jax.nn.sigmoid(h2 @ w3 + b3)


# TODO(synk): Action_Conditioned_FF.evaluate() is a host-side DataLoader/eval loop, not a kernel;
# only forward() is implemented here.

if __name__ == "__main__":
    key = jax.random.PRNGKey(0)
    kx, kp = jax.random.split(key)

    INPUT, HIDDEN, OUTPUT = 6, 32, 1
    params = init_params(kp, INPUT, HIDDEN, OUTPUT)

    # Small module-sized batch (single full-array block path, no padding).
    x_small = jax.random.normal(kx, (8, INPUT), jnp.float32)
    out_small = jax.block_until_ready(action_conditioned_ff(x_small, params))
    ref_small = reference_forward(x_small, params)
    assert out_small.shape == (8, OUTPUT)
    assert jnp.allclose(out_small, ref_small, atol=1e-5, rtol=1e-5), "mismatch (small batch)"

    # Ragged batch: 2 grid steps, last tile partially out-of-bounds (padding sliced off).
    x_rag = jax.random.normal(kx, (300, INPUT), jnp.float32)
    out_rag = jax.block_until_ready(action_conditioned_ff(x_rag, params))
    ref_rag = reference_forward(x_rag, params)
    assert out_rag.shape == (300, OUTPUT)
    assert jnp.allclose(out_rag, ref_rag, atol=1e-5, rtol=1e-5), "mismatch (ragged batch)"

    # Larger batch exercising the multi-step pipelined grid with zero padding waste.
    x_big = jax.random.normal(kx, (2560, INPUT), jnp.float32)
    out_big = jax.block_until_ready(action_conditioned_ff(x_big, params))
    ref_big = reference_forward(x_big, params)
    assert out_big.shape == (2560, OUTPUT)
    assert jnp.allclose(out_big, ref_big, atol=1e-5, rtol=1e-5), "mismatch (large batch)"

    print("KERNEL_OK")
</pallas_src>

<mosaic_0001>
module attributes {stable_mosaic.version = 11 : i64} {
  func.func @mlp_kernel(%arg0: i32, %arg1: memref<8x6xf32, #tpu.memory_space<vmem>>, %arg2: memref<32x6xf32, #tpu.memory_space<vmem>>, %arg3: memref<32x1xf32, #tpu.memory_space<vmem>>, %arg4: memref<32x32xf32, #tpu.memory_space<vmem>>, %arg5: memref<32x1xf32, #tpu.memory_space<vmem>>, %arg6: memref<32x1xf32, #tpu.memory_space<vmem>>, %arg7: memref<1x1xf32, #tpu.memory_space<smem>>, %arg8: memref<1x8xf32, #tpu.memory_space<vmem>>) attributes {dimension_semantics = [#tpu.dimension_semantics<parallel>], iteration_bounds = array<i64: 1>, scalar_prefetch = 0 : i64, scratch_operands = 0 : i64, tpu.core_type = #tpu.core_type<tc>, window_params = [{transform_indices = @transform_0, window_bounds = array<i64: 8, 6>}, {pipeline_mode = #tpu.pipeline_mode<synchronous>, transform_indices = @transform_1, window_bounds = array<i64: 32, 6>}, {pipeline_mode = #tpu.pipeline_mode<synchronous>, transform_indices = @transform_2, window_bounds = array<i64: 32, 1>}, {pipeline_mode = #tpu.pipeline_mode<synchronous>, transform_indices = @transform_3, window_bounds = array<i64: 32, 32>}, {pipeline_mode = #tpu.pipeline_mode<synchronous>, transform_indices = @transform_4, window_bounds = array<i64: 32, 1>}, {pipeline_mode = #tpu.pipeline_mode<synchronous>, transform_indices = @transform_5, window_bounds = array<i64: 32, 1>}, {transform_indices = @transform_6, window_bounds = array<i64: 1, 1>}, {transform_indices = @transform_7, window_bounds = array<i64: 1, 8>}]} {
    %c0 = arith.constant 0 : index
    %c0_0 = arith.constant 0 : index
    %0 = vector.load %arg2[%c0, %c0_0] : memref<32x6xf32, #tpu.memory_space<vmem>>, vector<32x6xf32>
    %c0_1 = arith.constant 0 : index
    %c0_2 = arith.constant 0 : index
    %1 = vector.load %arg1[%c0_1, %c0_2] : memref<8x6xf32, #tpu.memory_space<vmem>>, vector<8x6xf32>
    %cst = arith.constant dense<0.000000e+00> : vector<32x8xf32>
    %2 = tpu.matmul %0, %1, %cst {dimension_numbers = #tpu.dot_dimension_numbers<[1], [1], [0], [0], [0, 0, 1, 0], [], []>} : vector<32x6xf32>, vector<8x6xf32>, vector<32x8xf32> -> vector<32x8xf32>
    %c0_3 = arith.constant 0 : index
    %c0_4 = arith.constant 0 : index
    %3 = vector.load %arg3[%c0_3, %c0_4] : memref<32x1xf32, #tpu.memory_space<vmem>>, vector<32x1xf32>
    %4 = vector.broadcast %3 : vector<32x1xf32> to vector<32x8xf32>
    %5 = arith.addf %2, %4 : vector<32x8xf32>
    %cst_5 = arith.constant 0.000000e+00 : f32
    %6 = vector.broadcast %cst_5 : f32 to vector<32x8xf32>
    %7 = arith.maximumf %5, %6 : vector<32x8xf32>
    %c0_6 = arith.constant 0 : index
    %c0_7 = arith.constant 0 : index
    %8 = vector.load %arg4[%c0_6, %c0_7] : memref<32x32xf32, #tpu.memory_space<vmem>>, vector<32x32xf32>
    %cst_8 = arith.constant dense<0.000000e+00> : vector<32x8xf32>
    %9 = tpu.matmul %8, %7, %cst_8 {dimension_numbers = #tpu.dot_dimension_numbers<[1], [0], [0], [1], [0, 0, 1, 1], [], []>} : vector<32x32xf32>, vector<32x8xf32>, vector<32x8xf32> -> vector<32x8xf32>
    %c0_9 = arith.constant 0 : index
    %c0_10 = arith.constant 0 : index
    %10 = vector.load %arg5[%c0_9, %c0_10] : memref<32x1xf32, #tpu.memory_space<vmem>>, vector<32x1xf32>
    %11 = vector.broadcast %10 : vector<32x1xf32> to vector<32x8xf32>
    %12 = arith.addf %9, %11 : vector<32x8xf32>
    %cst_11 = arith.constant 0.000000e+00 : f32
    %13 = vector.broadcast %cst_11 : f32 to vector<32x8xf32>
    %14 = arith.maximumf %12, %13 : vector<32x8xf32>
    %c0_12 = arith.constant 0 : index
    %c0_13 = arith.constant 0 : index
    %15 = vector.load %arg6[%c0_12, %c0_13] : memref<32x1xf32, #tpu.memory_space<vmem>>, vector<32x1xf32>
    %16 = vector.broadcast %15 : vector<32x1xf32> to vector<32x8xf32>
    %17 = arith.mulf %14, %16 : vector<32x8xf32>
    %cst_14 = arith.constant dense<0.000000e+00> : vector<8xf32>
    %18 = vector.multi_reduction <add>, %17, %cst_14 [0] : vector<32x8xf32> to vector<8xf32>
    %19 = vector.shape_cast %18 : vector<8xf32> to vector<1x8xf32>
    %c0_15 = arith.constant 0 : index
    %c0_16 = arith.constant 0 : index
    %20 = memref.load %arg7[%c0_15, %c0_16] : memref<1x1xf32, #tpu.memory_space<smem>>
    %21 = vector.broadcast %20 : f32 to vector<1x8xf32>
    %22 = arith.addf %19, %21 : vector<1x8xf32>
    %cst_17 = arith.constant 0.000000e+00 : f32
    %23 = vector.broadcast %cst_17 : f32 to vector<1x8xf32>
    %24 = arith.subf %23, %22 : vector<1x8xf32>
    %25 = math.exp %24 : vector<1x8xf32>
    %cst_18 = arith.constant 1.000000e+00 : f32
    %26 = vector.broadcast %cst_18 : f32 to vector<1x8xf32>
    %27 = arith.addf %26, %25 : vector<1x8xf32>
    %28 = tpu.reciprocal %27 : vector<1x8xf32> -> vector<1x8xf32>
    %c0_19 = arith.constant 0 : index
    %c0_20 = arith.constant 0 : index
    %29 = vector.load %arg8[%c0_19, %c0_20] : memref<1x8xf32, #tpu.memory_space<vmem>>, vector<1x8xf32>
    tpu.vector_store %arg8[%c0_19, %c0_20], %28 {strides = array<i32>} : memref<1x8xf32, #tpu.memory_space<vmem>>, vector<1x8xf32>,
    return
  }
  func.func @transform_0(%arg0: i32) -> (i32, i32) {
    %c0_i32 = arith.constant 0 : i32
    %c0_i32_0 = arith.constant 0 : i32
    return %arg0, %c0_i32 : i32, i32
  }
  func.func @transform_1(%arg0: i32) -> (i32, i32) {
    %c0_i32 = arith.constant 0 : i32
    %c0_i32_0 = arith.constant 0 : i32
    %c0_i32_1 = arith.constant 0 : i32
    return %c0_i32, %c0_i32_0 : i32, i32
  }
  func.func @transform_2(%arg0: i32) -> (i32, i32) {
    %c0_i32 = arith.constant 0 : i32
    %c0_i32_0 = arith.constant 0 : i32
    %c0_i32_1 = arith.constant 0 : i32
    return %c0_i32, %c0_i32_0 : i32, i32
  }
  func.func @transform_3(%arg0: i32) -> (i32, i32) {
    %c0_i32 = arith.constant 0 : i32
    %c0_i32_0 = arith.constant 0 : i32
    %c0_i32_1 = arith.constant 0 : i32
    return %c0_i32, %c0_i32_0 : i32, i32
  }
  func.func @transform_4(%arg0: i32) -> (i32, i32) {
    %c0_i32 = arith.constant 0 : i32
    %c0_i32_0 = arith.constant 0 : i32
    %c0_i32_1 = arith.constant 0 : i32
    return %c0_i32, %c0_i32_0 : i32, i32
  }
  func.func @transform_5(%arg0: i32) -> (i32, i32) {
    %c0_i32 = arith.constant 0 : i32
    %c0_i32_0 = arith.constant 0 : i32
    %c0_i32_1 = arith.constant 0 : i32
    return %c0_i32, %c0_i32_0 : i32, i32
  }
  func.func @transform_6(%arg0: i32) -> (i32, i32) {
    %c0_i32 = arith.constant 0 : i32
    %c0_i32_0 = arith.constant 0 : i32
    %c0_i32_1 = arith.constant 0 : i32
    return %c0_i32, %c0_i32_0 : i32, i32
  }
  func.func @transform_7(%arg0: i32) -> (i32, i32) {
    %c0_i32 = arith.constant 0 : i32
    %c0_i32_0 = arith.constant 0 : i32
    return %c0_i32, %arg0 : i32, i32
  }
}

</mosaic_0001>

<llo_original>
// kernel: tpu_custom_call.1
$region0: #{tpu_custom_call.1}
  #allocation0 [shape = 'u32[]', space=smem, size = 0x4, offset = 0x4, fixed_abs, tag = 'smem constant byte address 0x4 - core index']
  #allocation1 [shape = 'u32[72,128]{1,0:T(1,128)}', space=vmem, size = 0x9000, scoped, tag = 'internal scratch']
  #allocation2 [shape = 'f32[1,1]{1,0:T(1,128)S(6)}', space=smem, size = 0x200, scoped, tag = 'scoped memory for tpu_custom_call.1']
  %s0 = inlined_call_operand.vmem [shape: f32[8,6], index: 0, kind: input, shape index: {}]
  %s1 = inlined_call_operand.vmem [shape: f32[32,6], index: 1, kind: input, shape index: {}]
  %s2 = inlined_call_operand.vmem [shape: f32[32,1], index: 2, kind: input, shape index: {}]
  %s3 = inlined_call_operand.vmem [shape: f32[32,32], index: 3, kind: input, shape index: {}]
  %s4 = inlined_call_operand.vmem [shape: f32[32,1], index: 4, kind: input, shape index: {}]
  %s5 = inlined_call_operand.vmem [shape: f32[32,1], index: 5, kind: input, shape index: {}]
  %s6 = inlined_call_operand.<no memory space> [shape: f32[1,1], index: 6, kind: input, shape index: {}]
  %s7 = inlined_call_operand.hbm [shape: f32[1,8], index: 7, kind: output, shape index: {}]
  %s8 = sld [smem:[#allocation0]]
  $region38: #{tpu_custom_call.1} parent=0
    _
  %s10 = ssub.s32 1, %s8
  %s11 = scalar_select 0, %s10, %s8
  %12 = sst [smem:[#allocation2]] %s6
  $region1: #{tpu_custom_call.1} parent=0
    #allocation3 [shape = 'u8[512]{0}', space=vmem, size = 0x400, scoped, tag = 'output window, operand 0, single buffered']
    #allocation4 [shape = 's32[1]{0}', space=sflag, size = 0x4, scoped, tag = 'scoped memory for tpu_custom_call.1']
    %13 = vsyncpa [#allocation4], 0
    // Predicated region
    $region2: #{tpu_custom_call.1} parent=1 // pred_check
      _
    $region3: #{tpu_custom_call.1} parent=1 // pred_check_branch
      %15 = sbr.rel (0) target = $region5
    $region4: #{tpu_custom_call.1} parent=1 // pred_region
      _
    $region5: #{tpu_custom_call.1} parent=1 // pred_fallthru
      _
    // Predicated region
    $region6: #{tpu_custom_call.1} parent=1 // pred_check
      _
    $region7: #{tpu_custom_call.1} parent=1 // pred_check_branch
      %17 = sbr.rel (0) target = $region9
    $region8: #{tpu_custom_call.1} parent=1 // pred_region
      _
    $region9: #{tpu_custom_call.1} parent=1 // pred_fallthru
      _
    // Predicated region
    $region10: #{tpu_custom_call.1} parent=1 // pred_check
      _
    $region11: #{tpu_custom_call.1} parent=1 // pred_check_branch
      %19 = sbr.rel (0) target = $region13
    $region12: #{tpu_custom_call.1} parent=1 // pred_region
      _
    $region13: #{tpu_custom_call.1} parent=1 // pred_fallthru
      _
    // Predicated region
    $region14: #{tpu_custom_call.1} parent=1 // pred_check
      _
    $region15: #{tpu_custom_call.1} parent=1 // pred_check_branch
      %21 = sbr.rel (0) target = $region17
    $region16: #{tpu_custom_call.1} parent=1 // pred_region
      _
    $region17: #{tpu_custom_call.1} parent=1 // pred_fallthru
      _
    // Predicated region
    $region18: #{tpu_custom_call.1} parent=1 // pred_check
      _
    $region19: #{tpu_custom_call.1} parent=1 // pred_check_branch
      %23 = sbr.rel (0) target = $region21
    $region20: #{tpu_custom_call.1} parent=1 // pred_region
      _
    $region21: #{tpu_custom_call.1} parent=1 // pred_fallthru
      _
    // Predicated region
    $region22: #{tpu_custom_call.1} parent=1 // pred_check
      _
    $region23: #{tpu_custom_call.1} parent=1 // pred_check_branch
      %25 = sbr.rel (0) target = $region25
    $region24: #{tpu_custom_call.1} parent=1 // pred_region
      _
    $region25: #{tpu_custom_call.1} parent=1 // pred_fallthru
      _
    // Predicated region
    $region26: #{tpu_custom_call.1} parent=1 // pred_check
      _
    $region27: #{tpu_custom_call.1} parent=1 // pred_check_branch
      %27 = sbr.rel (0) target = $region29
    $region28: #{tpu_custom_call.1} parent=1 // pred_region
      _
    $region29: #{tpu_custom_call.1} parent=1 // pred_fallthru
      _
    %v28 = vld [vmem:[%s1] sm:$0xff]
    %v29 = vld [vmem:[%s1 + $0x8] sm:$0xff]
    %v30 = vld [vmem:[%s1 + $0x10] sm:$0xff]
    %v31 = vld [vmem:[%s1 + $0x18] sm:$0xff]
    %v32 = vld [vmem:[%s0] sm:$0xff]
    %v33 = vld [vmem:[%s2] sm:$0xff]
    %v34 = vld [vmem:[%s2 + $0x8] sm:$0xff]
    %v35 = vld [vmem:[%s2 + $0x10] sm:$0xff]
    %v36 = vld [vmem:[%s2 + $0x18] sm:$0xff]
    %38 = vset.pattern.permute.xlu0 0
    %39 = vperm.xlu0 %38, %v33
    %v40 = vpop.permute.xlu0 %39
    %43 = vset.pattern.permute.xlu0 0
    %44 = vperm.xlu0 %43, %v34
    %v45 = vpop.permute.xlu0 %44
    %48 = vset.pattern.permute.xlu0 0
    %49 = vperm.xlu0 %48, %v35
    %v50 = vpop.permute.xlu0 %49
    %53 = vset.pattern.permute.xlu0 0
    %54 = vperm.xlu0 %53, %v36
    %v55 = vpop.permute.xlu0 %54
    %vm57 = vcmask 48128
    %v59 = vsel %vm57, %v28, 0
    %v62 = vsel %vm57, %v29, 0
    %v65 = vsel %vm57, %v30, 0
    %v68 = vsel %vm57, %v31, 0
    %v71 = vsel %vm57, %v32, 0
    %73 = vmatpush.xpose.msra.mxu0 0.0
    %74 = vmatpush.xpose.msra.mxu0 0.0
    %75 = vmatpush.xpose.msra.mxu0 0.0
    %76 = vmatpush.xpose.msra.mxu0 0.0
    %77 = vmatpush.xpose.msra.mxu0 0.0
    %78 = vmatpush.xpose.msra.mxu0 0.0
    %79 = vmatpush.xpose.msra.mxu0 0.0
    %80 = vmatpush.xpose.msra.mxu0 0.0
    %81 = vmatpush.xpose.msra.mxu0 0.0
    %82 = vmatpush.xpose.msra.mxu0 0.0
    %83 = vmatpush.xpose.msra.mxu0 0.0
    %84 = vmatpush.xpose.msra.mxu0 0.0
    %85 = vmatpush.xpose.msra.mxu0 0.0
    %86 = vmatpush.xpose.msra.mxu0 0.0
    %87 = vmatpush.xpose.msra.mxu0 0.0
    %88 = vmatpush.xpose.msra.mxu0 %v71
    %89 = vmatmul.f32.gmra.mxu0 %v59
    %v90 = vpop.f32.mrf.mxu0
    %v91 = vadd.f32 %v40, %v90
    %92 = vmatmul.f32.gmra.mxu0 %v62
    %v93 = vpop.f32.mrf.mxu0
    %v94 = vadd.f32 %v45, %v93
    %95 = vmatmul.f32.gmra.mxu0 %v65
    %v96 = vpop.f32.mrf.mxu0
    %v97 = vadd.f32 %v50, %v96
    %98 = vmatmul.f32.gmra.mxu0 %v68
    %v99 = vpop.f32.mrf.mxu0
    %v100 = vadd.f32 %v55, %v99
    %101 = vdwg.mxu0
    %v102 = vmax.f32 %v91, 0.0
    %v103 = vmax.f32 %v94, 0.0
    %v104 = vmax.f32 %v97, 0.0
    %v105 = vmax.f32 %v100, 0.0
    %v106 = vld [vmem:[%s3] sm:$0xff]
    %v107 = vld [vmem:[%s3 + $0x8] sm:$0xff]
    %v108 = vld [vmem:[%s3 + $0x10] sm:$0xff]
    %v109 = vld [vmem:[%s3 + $0x18] sm:$0xff]
    %v110 = vld [vmem:[%s4] sm:$0xff]
    %v111 = vld [vmem:[%s4 + $0x8] sm:$0xff]
    %v112 = vld [vmem:[%s4 + $0x10] sm:$0xff]
    %v113 = vld [vmem:[%s4 + $0x18] sm:$0xff]
    %115 = vset.pattern.permute.xlu0 0
    %116 = vperm.xlu0 %115, %v110
    %v117 = vpop.permute.xlu0 %116
    %120 = vset.pattern.permute.xlu0 0
    %121 = vperm.xlu0 %120, %v111
    %v122 = vpop.permute.xlu0 %121
    %125 = vset.pattern.permute.xlu0 0
    %126 = vperm.xlu0 %125, %v112
    %v127 = vpop.permute.xlu0 %126
    %130 = vset.pattern.permute.xlu0 0
    %131 = vperm.xlu0 %130, %v113
    %v132 = vpop.permute.xlu0 %131
    %vm134 = vcmask 261120
    %v136 = vsel %vm134, %v106, 0
    %v139 = vsel %vm134, %v107, 0
    %v142 = vsel %vm134, %v108, 0
    %v145 = vsel %vm134, %v109, 0
    %147 = vmatpush.msra.mxu0 0.0
    %148 = vmatpush.msra.mxu0 0.0
    %149 = vmatpush.msra.mxu0 0.0
    %150 = vmatpush.msra.mxu0 0.0
    %151 = vmatpush.msra.mxu0 0.0
    %152 = vmatpush.msra.mxu0 0.0
    %153 = vmatpush.msra.mxu0 0.0
    %154 = vmatpush.msra.mxu0 0.0
    %155 = vmatpush.msra.mxu0 0.0
    %156 = vmatpush.msra.mxu0 0.0
    %157 = vmatpush.msra.mxu0 0.0
    %158 = vmatpush.msra.mxu0 0.0
    %159 = vmatpush.msra.mxu0 %v105
    %160 = vmatpush.msra.mxu0 %v104
    %161 = vmatpush.msra.mxu0 %v103
    %162 = vmatpush.msra.mxu0 %v102
    %163 = vmatmul.f32.gmra.mxu0 %v136
    %v164 = vpop.f32.mrf.mxu0
    %v165 = vadd.f32 %v117, %v164
    %166 = vmatmul.f32.gmra.mxu0 %v139
    %v167 = vpop.f32.mrf.mxu0
    %v168 = vadd.f32 %v122, %v167
    %169 = vmatmul.f32.gmra.mxu0 %v142
    %v170 = vpop.f32.mrf.mxu0
    %v171 = vadd.f32 %v127, %v170
    %172 = vmatmul.f32.gmra.mxu0 %v145
    %v173 = vpop.f32.mrf.mxu0
    %v174 = vadd.f32 %v132, %v173
    %175 = vdwg.mxu0
    %v176 = vmax.f32 %v165, 0.0
    %v177 = vmax.f32 %v168, 0.0
    %v178 = vmax.f32 %v171, 0.0
    %v179 = vmax.f32 %v174, 0.0
    %v180 = vld [vmem:[%s5] sm:$0xff]
    %v181 = vld [vmem:[%s5 + $0x8] sm:$0xff]
    %v182 = vld [vmem:[%s5 + $0x10] sm:$0xff]
    %v183 = vld [vmem:[%s5 + $0x18] sm:$0xff]
    %185 = vset.pattern.permute.xlu0 0
    %186 = vperm.xlu0 %185, %v180
    %v187 = vpop.permute.xlu0 %186
    %190 = vset.pattern.permute.xlu0 0
    %191 = vperm.xlu0 %190, %v181
    %v192 = vpop.permute.xlu0 %191
    %195 = vset.pattern.permute.xlu0 0
    %196 = vperm.xlu0 %195, %v182
    %v197 = vpop.permute.xlu0 %196
    %200 = vset.pattern.permute.xlu0 0
    %201 = vperm.xlu0 %200, %v183
    %v202 = vpop.permute.xlu0 %201
    %v204 = vmul.f32 %v176, %v187
    %v205 = vmul.f32 %v177, %v192
    %v206 = vmul.f32 %v178, %v197
    %v207 = vmul.f32 %v179, %v202
    %vm208 = vcmask 64512
    %v209 = vsel %vm208, %v204, 0.0
    %v210 = vsel %vm208, %v205, 0.0
    %v211 = vadd.f32 %v209, %v210
    %v212 = vsel %vm208, %v206, 0.0
    %v213 = vadd.f32 %v211, %v212
    %v214 = vsel %vm208, %v207, 0.0
    %v215 = vadd.f32 %v213, %v214
    %v216 = vrot.slane %v215, 4
    %v217 = vadd.f32 %v215, %v216
    %v218 = vrot.slane %v217, 2
    %v219 = vadd.f32 %v217, %v218
    %v220 = vrot.slane %v219, 1
    %v221 = vadd.f32 %v219, %v220
    %s222 = sld [smem:[#allocation2]]
    %v223 = vstv %s222
    %v224 = vadd.f32 %v221, %v223
    %v225 = vsub.f32 0.0, %v224
    %v226 = vmul.f32 %v225, 1.442695
    %v227 = vpow.pop %v226
    %v228 = vadd.f32 %v227, 1.0
    %v229 = vrcp.pop %v228
    %v230 = vmul.f32 %v228, %v229
    %v231 = vsub.f32 1.0, %v230
    %v232 = vmul.f32 %v229, %v231
    %v233 = vadd.f32 %v229, %v232
    %vm234 = vweird.f32 %v228
    %vm235 = vweird.f32 %v229
    %vm236 = vmor %vm234, %vm235
    %v237 = vsel %vm236, %v229, %v233
    %v238 = vand.u32 2147483647, %v228
    %vm239 = vcmp.eq.f32.partialorder %v238, 8.507059e+37
    %v240 = vand.u32 %v228, 2147483648
    %v241 = vor.u32 1.1754944e-38, %v240
    %v242 = vsel %vm239, %v241, %v237
    %vm243 = vcmask 57344
    %244 = vst.msk [vmem:[#allocation3] sm:$0x1] %vm243, %v242
    // Predicated region
    $region30: #{tpu_custom_call.1} parent=1 // pred_check
      _
    $region31: #{tpu_custom_call.1} parent=1 // pred_check_branch
      %246 = sbr.rel (0) target = $region33
    $region32: #{tpu_custom_call.1} parent=1 // pred_region
      %248 = vsyncadd [#allocation4], 0
      %s250 = sshll.u32 [#allocation3], 4
      %s251 = int_to_ptr.vmem [resolvable:$true] %s250
      %s252 = sshll.u32 %s7, 4
      %s253 = int_to_ptr.hbm [resolvable:$true] %s252
      %255 = dma.vmem_to_hbm [thread:$0]  %s251, 16, %s253, [#allocation4]
    $region33: #{tpu_custom_call.1} parent=1 // pred_fallthru
      _
    // Predicated region
    $region34: #{tpu_custom_call.1} parent=1 // pred_check
      _
    $region35: #{tpu_custom_call.1} parent=1 // pred_check_branch
      %257 = sbr.rel (0) target = $region37
    $region36: #{tpu_custom_call.1} parent=1 // pred_region
      %259 = dma.done [#allocation4], 16
    $region37: #{tpu_custom_call.1} parent=1 // pred_fallthru
      _
    %260 = vsyncpa [#allocation4], 1

</llo_original>
